<compile_context>
chip_gen: v5e
topology: v5e:2x2
jax: 0.10.0
libtpu: 0.0.40
codegen_flags: <defaults>
</compile_context>

<pallas_src>
import numpy as np
import jax
import jax.numpy as jnp
from jax import lax
from jax.experimental import pallas as pl
from jax.experimental.pallas import tpu as pltpu

# ---------------- static (small, LaneATT-like) configuration ----------------
B = 2                 # batch
C_IN = 3              # image channels
IMG_H = IMG_W = 32    # image size
STRIDE = 4            # synthetic backbone stride
KSIZE = 3
C_BK = 16             # synthetic backbone channels
C_FV = 8              # feature_volume_channels
HF = IMG_H // STRIDE  # feature volume height  (8)
WF = IMG_W // STRIDE  # feature volume width   (8)
N_ANCHORS = 16        # number of anchor proposals
D = C_FV * HF         # flattened anchor feature length (64), c-major: d = c*HF + h
KK = C_IN * KSIZE * KSIZE  # 27


# =============================== Pallas kernel ===============================
def _laneatt_kernel(p_ref, w1_ref, b1_ref, w2_ref, b2_ref,
                    rep_ref, mc_ref, g4_ref, wa_ref, ba_ref, o_ref):
    """Fused LaneATT forward for the whole (B=2) batch in one invocation.

    p_ref  : (B*HF*WF, KK)   im2col patches, rows ordered (b, h, w)
    w1_ref : (KK, C_BK)      3x3 conv weight as matmul matrix (rows (c,ky,kx))
    b1_ref : (1, C_BK)
    w2_ref : (C_BK, C_FV)    1x1 conv weight
    b2_ref : (1, C_FV)
    rep_ref: (C_FV, D)       static channel-replication matrix, rep[c, c*HF+h] = 1
    mc_ref : (B*HF*WF, D)    static structural mask, mc[(b,h,w), c*HF+h] = 1
    g4_ref : (B*N, B*HF*WF)  static one-hot anchor gather (invalid (n,h) -> zeros)
    wa_ref : (D, N)          attention Linear weight, padded with a zero column
    ba_ref : (1, N)          attention Linear bias, padded with -1e30
    o_ref  : (N, B*D)        attention features, the two batches lane-adjacent
    """
    # ---- backbone: both batch elements folded into the 128 matmul rows ----
    h1 = jnp.dot(p_ref[...], w1_ref[...], preferred_element_type=jnp.float32) + b1_ref[...]
    h1 = jnp.maximum(h1, 0.0)
    fv = jnp.dot(h1, w2_ref[...], preferred_element_type=jnp.float32) + b2_ref[...]   # (128, C_FV)

    # ---- anchor-feature cut (both batches) as ONE gather matmul ----
    # z[(b,h,w), c*HF+h'] = fv[(b,h,w), c] * (h == h')
    z = jnp.dot(fv, rep_ref[...], preferred_element_type=jnp.float32) * mc_ref[...]   # (128, D)
    # baf[(b,n), c*HF+h] = feature volume at (b, c, h, x_cut[n,h]); 0 where invalid
    baf = jnp.dot(g4_ref[...], z, preferred_element_type=jnp.float32)                 # (B*N, D)

    # ---- attention Linear + softmax (rows are (batch, anchor); softmax is row-wise) ----
    logits = jnp.dot(baf, wa_ref[...], preferred_element_type=jnp.float32) + ba_ref[...]  # (B*N, N)
    mx = jnp.max(logits, axis=-1, keepdims=True)
    e = jnp.exp(logits - mx)
    # EUP reciprocal; padded column N-1 has exp(-1e30 - mx) == 0, so the sum is exact.
    sp = e * pl.reciprocal(jnp.sum(e, axis=-1, keepdims=True), approx=True)            # (B*N, N)

    # ---- off-diagonal attention matrix: att[r, j] = scores[r, j - (j > n)], 0 on diag ----
    rolled = pltpu.roll(sp, shift=1, axis=1)                       # rolled[:, j] = sp[:, j-1]
    ai = lax.broadcasted_iota(jnp.int32, (B * N_ANCHORS, N_ANCHORS), 0) % N_ANCHORS
    ji = lax.broadcasted_iota(jnp.int32, (B * N_ANCHORS, N_ANCHORS), 1)
    att = jnp.where(ji < ai, sp, jnp.where(ji == ai, 0.0, rolled))  # (B*N, N)

    # ---- attention features: out_b = att_b @ baf_b; batches lane-adjacent (dense store) ----
    for b in range(B):
        att_b = att[b * N_ANCHORS:(b + 1) * N_ANCHORS]
        baf_b = baf[b * N_ANCHORS:(b + 1) * N_ANCHORS]
        o_ref[:, b * D:(b + 1) * D] = jnp.dot(att_b, baf_b,
                                              preferred_element_type=jnp.float32)


# ============================= pallas_call wrapper =============================
@jax.jit
def laneatt_forward_pallas(x, kp):
    # im2col patches via ONE XLA conv with a static one-hot kernel; NHWC output makes
    # the reshape to (B*HF*WF, KK) free (pure row-major reshape).
    patches = lax.conv_general_dilated(
        x, kp["patch_k"], (STRIDE, STRIDE), ((1, 1), (1, 1)),
        dimension_numbers=("NCHW", "OIHW", "NHWC"),
        precision=lax.Precision.HIGHEST)
    patches = patches.reshape(B * HF * WF, KK)

    out2 = pl.pallas_call(
        _laneatt_kernel,
        out_shape=jax.ShapeDtypeStruct((N_ANCHORS, B * D), jnp.float32),
        in_specs=[pl.BlockSpec(memory_space=pltpu.MemorySpace.VMEM)] * 10,
        out_specs=pl.BlockSpec(memory_space=pltpu.MemorySpace.VMEM),
    )(patches, kp["w1m"], kp["b1m"], kp["w2m"], kp["b2m"],
      kp["rep"], kp["mc"], kp["g4"], kp["w_attm"], kp["b_attm"])

    # (N, B*D) -> (B, N, D): single cheap 8 KB rearrangement.
    return out2.reshape(N_ANCHORS, B, D).transpose(1, 0, 2)


# ============================ pure-JAX reference ==============================
def laneatt_forward_reference(x, params, x_cut, invalid):
    w1, b1, w2, b2 = params["w1"], params["b1"], params["w2"], params["b2"]
    w_att, b_att = params["w_att"], params["b_att"]

    fv = lax.conv_general_dilated(x, w1, (STRIDE, STRIDE), ((1, 1), (1, 1)),
                                  dimension_numbers=("NCHW", "OIHW", "NCHW"))
    fv = jnp.maximum(fv + b1[None, :, None, None], 0.0)
    fv = lax.conv_general_dilated(fv, w2, (1, 1), ((0, 0), (0, 0)),
                                  dimension_numbers=("NCHW", "OIHW", "NCHW"))
    fv = fv + b2[None, :, None, None]                                # (B, C_FV, HF, WF)

    y_idx = jnp.broadcast_to(jnp.arange(HF)[None, :], (N_ANCHORS, HF))
    gathered = fv[:, :, y_idx, x_cut]                                # (B, C_FV, N, HF)
    gathered = jnp.where(invalid[None, None, :, :], 0.0, gathered)
    baf = jnp.transpose(gathered, (0, 2, 1, 3)).reshape(B, N_ANCHORS, D)   # c-major

    logits = baf.reshape(B * N_ANCHORS, D) @ w_att + b_att
    scores = jax.nn.softmax(logits, axis=1).reshape(B, N_ANCHORS, N_ANCHORS - 1)

    ii = jnp.arange(N_ANCHORS)[:, None]
    jj = jnp.arange(N_ANCHORS)[None, :]
    idx = jnp.where(jj < ii, jj, jnp.clip(jj - 1, 0, N_ANCHORS - 2))
    att = jnp.take_along_axis(scores, jnp.broadcast_to(idx[None], (B, N_ANCHORS, N_ANCHORS)), axis=2)
    att = jnp.where((jj == ii)[None], 0.0, att)

    return jnp.einsum("bij,bjd->bid", att, baf)


# ========================= deterministic params/anchors =======================
def make_params():
    key = jax.random.PRNGKey(0)
    k = jax.random.split(key, 8)
    params = {
        "w1": 0.1 * jax.random.normal(k[0], (C_BK, C_IN, KSIZE, KSIZE), jnp.float32),
        "b1": 0.1 * jax.random.normal(k[1], (C_BK,), jnp.float32),
        "w2": 0.1 * jax.random.normal(k[2], (C_FV, C_BK, 1, 1), jnp.float32),
        "b2": 0.1 * jax.random.normal(k[3], (C_FV,), jnp.float32),
        "w_att": 0.1 * jax.random.normal(k[4], (D, N_ANCHORS - 1), jnp.float32),
        "b_att": 0.1 * jax.random.normal(k[5], (N_ANCHORS - 1,), jnp.float32),
    }
    x = jax.random.normal(k[6], (B, C_IN, IMG_H, IMG_W), jnp.float32)
    return params, x


def make_anchors():
    """Deterministic synthetic anchor cut indices + invalid mask (numpy)."""
    n_idx = np.arange(N_ANCHORS)[:, None]
    y_idx = np.arange(HF)[None, :]
    x_raw = (2 * n_idx + y_idx) % 11 - 1          # some anchors run out of the volume
    invalid = (x_raw < 0) | (x_raw >= WF)
    x_cut = np.clip(x_raw, 0, WF - 1)
    return x_cut.astype(np.int32), invalid


def make_static_consts(x_cut, invalid):
    """One-time host-side numpy constants (im2col kernel + gather matrices)."""
    # Patch-extraction one-hot conv kernel: output channel index = c*9 + ky*3 + kx.
    patch_k = np.zeros((KK, C_IN, KSIZE, KSIZE), np.float32)
    for c in range(C_IN):
        for ky in range(KSIZE):
            for kx in range(KSIZE):
                patch_k[c * KSIZE * KSIZE + ky * KSIZE + kx, c, ky, kx] = 1.0

    # rep: (C_FV, D) channel-replication matrix, rep[c, c*HF + h] = 1 for all h.
    rep = np.zeros((C_FV, D), np.float32)
    for c in range(C_FV):
        rep[c, c * HF:(c + 1) * HF] = 1.0

    # mc: (B*HF*WF, D) structural mask, mc[(b,h,w), c*HF + h] = 1.
    mc = np.zeros((B * HF * WF, D), np.float32)
    for b in range(B):
        for h in range(HF):
            for w in range(WF):
                r = b * HF * WF + h * WF + w
                mc[r, np.arange(C_FV) * HF + h] = 1.0

    # g4: (B*N, B*HF*WF) one-hot anchor gather, block diagonal over batch;
    # rows of invalid (n, h) pairs stay zero so those features are cut to 0.
    g4 = np.zeros((B * N_ANCHORS, B * HF * WF), np.float32)
    for b in range(B):
        for n in range(N_ANCHORS):
            for h in range(HF):
                if not invalid[n, h]:
                    g4[b * N_ANCHORS + n, b * HF * WF + h * WF + int(x_cut[n, h])] = 1.0

    return patch_k, rep, mc, g4


def make_kernel_params(params, patch_k, rep, mc, g4):
    """Kernel-layout parameters (computed once, eagerly, outside the jitted forward)."""
    w_att_p = jnp.concatenate([params["w_att"],
                               jnp.zeros((D, 1), jnp.float32)], axis=1)          # (D, N)
    b_att_p = jnp.concatenate([params["b_att"],
                               jnp.full((1,), -1e30, jnp.float32)])[None, :]     # (1, N)
    return {
        "patch_k": jnp.asarray(patch_k),
        "w1m": jnp.reshape(params["w1"], (C_BK, KK)).T,          # rows (c, ky, kx)
        "b1m": params["b1"][None, :],
        "w2m": params["w2"][:, :, 0, 0].T,                       # (C_BK, C_FV)
        "b2m": params["b2"][None, :],
        "w_attm": w_att_p,
        "b_attm": b_att_p,
        "rep": jnp.asarray(rep),
        "mc": jnp.asarray(mc),
        "g4": jnp.asarray(g4),
    }


# ==================================== main ====================================
if __name__ == "__main__":
    params, x = make_params()
    x_cut, invalid = make_anchors()
    patch_k, rep, mc, g4 = make_static_consts(x_cut, invalid)
    kparams = make_kernel_params(params, patch_k, rep, mc, g4)

    out = jax.block_until_ready(laneatt_forward_pallas(x, kparams))
    ref = jax.block_until_ready(
        laneatt_forward_reference(x, params, jnp.asarray(x_cut), jnp.asarray(invalid)))

    assert out.shape == (B, N_ANCHORS, D)
    np.testing.assert_allclose(np.asarray(out), np.asarray(ref), rtol=2e-3, atol=2e-3)
    print("KERNEL_OK")
</pallas_src>

<mosaic_0001>
module attributes {stable_mosaic.version = 11 : i64} {
  func.func @_laneatt_kernel(%arg0: memref<128x27xf32, #tpu.memory_space<vmem>>, %arg1: memref<27x16xf32, #tpu.memory_space<vmem>>, %arg2: memref<1x16xf32, #tpu.memory_space<vmem>>, %arg3: memref<16x8xf32, #tpu.memory_space<vmem>>, %arg4: memref<1x8xf32, #tpu.memory_space<vmem>>, %arg5: memref<8x64xf32, #tpu.memory_space<vmem>>, %arg6: memref<128x64xf32, #tpu.memory_space<vmem>>, %arg7: memref<32x128xf32, #tpu.memory_space<vmem>>, %arg8: memref<64x16xf32, #tpu.memory_space<vmem>>, %arg9: memref<1x16xf32, #tpu.memory_space<vmem>>, %arg10: memref<16x128xf32, #tpu.memory_space<vmem>>) attributes {dimension_semantics = [], scalar_prefetch = 0 : i64, scratch_operands = 0 : i64, tpu.core_type = #tpu.core_type<tc>} {
    %c0 = arith.constant 0 : index
    %c0_0 = arith.constant 0 : index
    %0 = vector.load %arg0[%c0, %c0_0] : memref<128x27xf32, #tpu.memory_space<vmem>>, vector<128x27xf32>
    %c0_1 = arith.constant 0 : index
    %c0_2 = arith.constant 0 : index
    %1 = vector.load %arg1[%c0_1, %c0_2] : memref<27x16xf32, #tpu.memory_space<vmem>>, vector<27x16xf32>
    %cst = arith.constant dense<0.000000e+00> : vector<128x16xf32>
    %2 = tpu.matmul %0, %1, %cst {dimension_numbers = #tpu.dot_dimension_numbers<[1], [0], [0], [1], [0, 0, 1, 1], [], []>} : vector<128x27xf32>, vector<27x16xf32>, vector<128x16xf32> -> vector<128x16xf32>
    %c0_3 = arith.constant 0 : index
    %c0_4 = arith.constant 0 : index
    %3 = vector.load %arg2[%c0_3, %c0_4] : memref<1x16xf32, #tpu.memory_space<vmem>>, vector<1x16xf32>
    %4 = vector.broadcast %3 : vector<1x16xf32> to vector<128x16xf32>
    %5 = arith.addf %2, %4 : vector<128x16xf32>
    %cst_5 = arith.constant 0.000000e+00 : f32
    %6 = vector.broadcast %cst_5 : f32 to vector<128x16xf32>
    %7 = arith.maximumf %5, %6 : vector<128x16xf32>
    %c0_6 = arith.constant 0 : index
    %c0_7 = arith.constant 0 : index
    %8 = vector.load %arg3[%c0_6, %c0_7] : memref<16x8xf32, #tpu.memory_space<vmem>>, vector<16x8xf32>
    %cst_8 = arith.constant dense<0.000000e+00> : vector<128x8xf32>
    %9 = tpu.matmul %7, %8, %cst_8 {dimension_numbers = #tpu.dot_dimension_numbers<[1], [0], [0], [1], [0, 0, 1, 1], [], []>} : vector<128x16xf32>, vector<16x8xf32>, vector<128x8xf32> -> vector<128x8xf32>
    %c0_9 = arith.constant 0 : index
    %c0_10 = arith.constant 0 : index
    %10 = vector.load %arg4[%c0_9, %c0_10] : memref<1x8xf32, #tpu.memory_space<vmem>>, vector<1x8xf32>
    %11 = vector.broadcast %10 : vector<1x8xf32> to vector<128x8xf32>
    %12 = arith.addf %9, %11 : vector<128x8xf32>
    %c0_11 = arith.constant 0 : index
    %c0_12 = arith.constant 0 : index
    %13 = vector.load %arg5[%c0_11, %c0_12] : memref<8x64xf32, #tpu.memory_space<vmem>>, vector<8x64xf32>
    %cst_13 = arith.constant dense<0.000000e+00> : vector<128x64xf32>
    %14 = tpu.matmul %12, %13, %cst_13 {dimension_numbers = #tpu.dot_dimension_numbers<[1], [0], [0], [1], [0, 0, 1, 1], [], []>} : vector<128x8xf32>, vector<8x64xf32>, vector<128x64xf32> -> vector<128x64xf32>
    %c0_14 = arith.constant 0 : index
    %c0_15 = arith.constant 0 : index
    %15 = vector.load %arg6[%c0_14, %c0_15] : memref<128x64xf32, #tpu.memory_space<vmem>>, vector<128x64xf32>
    %16 = arith.mulf %14, %15 : vector<128x64xf32>
    %c0_16 = arith.constant 0 : index
    %c0_17 = arith.constant 0 : index
    %17 = vector.load %arg7[%c0_16, %c0_17] : memref<32x128xf32, #tpu.memory_space<vmem>>, vector<32x128xf32>
    %cst_18 = arith.constant dense<0.000000e+00> : vector<32x64xf32>
    %18 = tpu.matmul %17, %16, %cst_18 {dimension_numbers = #tpu.dot_dimension_numbers<[1], [0], [0], [1], [0, 0, 1, 1], [], []>} : vector<32x128xf32>, vector<128x64xf32>, vector<32x64xf32> -> vector<32x64xf32>
    %c0_19 = arith.constant 0 : index
    %c0_20 = arith.constant 0 : index
    %19 = vector.load %arg8[%c0_19, %c0_20] : memref<64x16xf32, #tpu.memory_space<vmem>>, vector<64x16xf32>
    %cst_21 = arith.constant dense<0.000000e+00> : vector<32x16xf32>
    %20 = tpu.matmul %18, %19, %cst_21 {dimension_numbers = #tpu.dot_dimension_numbers<[1], [0], [0], [1], [0, 0, 1, 1], [], []>} : vector<32x64xf32>, vector<64x16xf32>, vector<32x16xf32> -> vector<32x16xf32>
    %c0_22 = arith.constant 0 : index
    %c0_23 = arith.constant 0 : index
    %21 = vector.load %arg9[%c0_22, %c0_23] : memref<1x16xf32, #tpu.memory_space<vmem>>, vector<1x16xf32>
    %22 = vector.broadcast %21 : vector<1x16xf32> to vector<32x16xf32>
    %23 = arith.addf %20, %22 : vector<32x16xf32>
    %cst_24 = arith.constant dense<0xFF800000> : vector<32xf32>
    %24 = vector.multi_reduction <maximumf>, %23, %cst_24 [1] : vector<32x16xf32> to vector<32xf32>
    %25 = vector.shape_cast %24 : vector<32xf32> to vector<32x1xf32>
    %26 = vector.broadcast %25 : vector<32x1xf32> to vector<32x16xf32>
    %27 = arith.subf %23, %26 : vector<32x16xf32>
    %28 = math.exp %27 : vector<32x16xf32>
    %cst_25 = arith.constant dense<0.000000e+00> : vector<32xf32>
    %29 = vector.multi_reduction <add>, %28, %cst_25 [1] : vector<32x16xf32> to vector<32xf32>
    %30 = vector.shape_cast %29 : vector<32xf32> to vector<32x1xf32>
    %31 = tpu.reciprocal %30 {approx = true} : vector<32x1xf32> -> vector<32x1xf32>
    %32 = vector.broadcast %31 : vector<32x1xf32> to vector<32x16xf32>
    %33 = arith.mulf %28, %32 : vector<32x16xf32>
    %c1_i32 = arith.constant 1 : i32
    %34 = tpu.dynamic_rotate %33 by %c1_i32 dim 1 : vector<32x16xf32>, i32 -> vector<32x16xf32>
    %35 = tpu.iota {dimensions = array<i32: 0>} : vector<32x16xi32>
    %c16_i32 = arith.constant 16 : i32
    %c0_i32 = arith.constant 0 : i32
    %36 = arith.cmpi eq, %c16_i32, %c0_i32 : i32
    %c1_i32_26 = arith.constant 1 : i32
    %37 = arith.select %36, %c1_i32_26, %c16_i32 : i32
    %38 = vector.broadcast %37 : i32 to vector<32x16xi32>
    %39 = arith.remsi %35, %38 : vector<32x16xi32>
    %c0_i32_27 = arith.constant 0 : i32
    %40 = vector.broadcast %c0_i32_27 : i32 to vector<32x16xi32>
    %41 = arith.cmpi ne, %39, %40 : vector<32x16xi32>
    %c0_i32_28 = arith.constant 0 : i32
    %42 = vector.broadcast %c0_i32_28 : i32 to vector<32x16xi32>
    %43 = arith.cmpi slt, %39, %42 : vector<32x16xi32>
    %c0_i32_29 = arith.constant 0 : i32
    %44 = arith.cmpi slt, %37, %c0_i32_29 : i32
    %45 = vector.broadcast %44 : i1 to vector<32x16xi1>
    %46 = vector.broadcast %45 : vector<32x16xi1> to vector<32x16xi1>
    %47 = arith.xori %43, %46 : vector<32x16xi1>
    %48 = arith.andi %47, %41 : vector<32x16xi1>
    %49 = vector.broadcast %37 : i32 to vector<32x16xi32>
    %50 = arith.addi %39, %49 : vector<32x16xi32>
    %51 = arith.select %48, %50, %39 : vector<32x16xi1>, vector<32x16xi32>
    %52 = tpu.iota {dimensions = array<i32: 1>} : vector<32x16xi32>
    %53 = arith.cmpi slt, %52, %51 : vector<32x16xi32>
    %54 = arith.cmpi eq, %52, %51 : vector<32x16xi32>
    %cst_30 = arith.constant 0.000000e+00 : f32
    %55 = vector.broadcast %cst_30 : f32 to vector<32x16xf32>
    %56 = arith.select %54, %55, %34 : vector<32x16xi1>, vector<32x16xf32>
    %57 = arith.select %53, %33, %56 : vector<32x16xi1>, vector<32x16xf32>
    %58 = vector.extract_strided_slice %57 {offsets = [0, 0], sizes = [16, 16], strides = [1, 1]} : vector<32x16xf32> to vector<16x16xf32>
    %59 = vector.extract_strided_slice %18 {offsets = [0, 0], sizes = [16, 64], strides = [1, 1]} : vector<32x64xf32> to vector<16x64xf32>
    %cst_31 = arith.constant dense<0.000000e+00> : vector<16x64xf32>
    %60 = tpu.matmul %58, %59, %cst_31 {dimension_numbers = #tpu.dot_dimension_numbers<[1], [0], [0], [1], [0, 0, 1, 1], [], []>} : vector<16x16xf32>, vector<16x64xf32>, vector<16x64xf32> -> vector<16x64xf32>
    %c0_32 = arith.constant 0 : index
    %c0_33 = arith.constant 0 : index
    %61 = vector.load %arg10[%c0_32, %c0_33] : memref<16x128xf32, #tpu.memory_space<vmem>>, vector<16x64xf32>
    tpu.vector_store %arg10[%c0_32, %c0_33], %60 {strides = array<i32>} : memref<16x128xf32, #tpu.memory_space<vmem>>, vector<16x64xf32>,
    %62 = vector.extract_strided_slice %57 {offsets = [16, 0], sizes = [16, 16], strides = [1, 1]} : vector<32x16xf32> to vector<16x16xf32>
    %63 = vector.extract_strided_slice %18 {offsets = [16, 0], sizes = [16, 64], strides = [1, 1]} : vector<32x64xf32> to vector<16x64xf32>
    %cst_34 = arith.constant dense<0.000000e+00> : vector<16x64xf32>
    %64 = tpu.matmul %62, %63, %cst_34 {dimension_numbers = #tpu.dot_dimension_numbers<[1], [0], [0], [1], [0, 0, 1, 1], [], []>} : vector<16x16xf32>, vector<16x64xf32>, vector<16x64xf32> -> vector<16x64xf32>
    %c0_35 = arith.constant 0 : index
    %c64 = arith.constant 64 : index
    %65 = vector.load %arg10[%c0_35, %c64] : memref<16x128xf32, #tpu.memory_space<vmem>>, vector<16x64xf32>
    tpu.vector_store %arg10[%c0_35, %c64], %64 {strides = array<i32>} : memref<16x128xf32, #tpu.memory_space<vmem>>, vector<16x64xf32>,
    return
  }
}

</mosaic_0001>

<llo_original>
// kernel: laneatt_forward_pallas.1
$region0: #{laneatt_forward_pallas.1}
  #allocation0 [shape = 'u32[]', space=smem, size = 0x4, offset = 0x4, fixed_abs, tag = 'smem constant byte address 0x4 - core index']
  #allocation1 [shape = 'u32[72,128]{1,0:T(1,128)}', space=vmem, size = 0x9000, scoped, tag = 'internal scratch']
  %s0 = inlined_call_operand.vmem [shape: f32[128,27], index: 0, kind: input, shape index: {}]
  %s1 = inlined_call_operand.vmem [shape: f32[27,16], index: 1, kind: input, shape index: {}]
  %s2 = inlined_call_operand.vmem [shape: f32[1,16], index: 2, kind: input, shape index: {}]
  %s3 = inlined_call_operand.vmem [shape: f32[16,8], index: 3, kind: input, shape index: {}]
  %s4 = inlined_call_operand.vmem [shape: f32[1,8], index: 4, kind: input, shape index: {}]
  %s5 = inlined_call_operand.vmem [shape: f32[8,64], index: 5, kind: input, shape index: {}]
  %s6 = inlined_call_operand.vmem [shape: f32[128,64], index: 6, kind: input, shape index: {}]
  %s7 = inlined_call_operand.vmem [shape: f32[32,128], index: 7, kind: input, shape index: {}]
  %s8 = inlined_call_operand.vmem [shape: f32[64,16], index: 8, kind: input, shape index: {}]
  %s9 = inlined_call_operand.vmem [shape: f32[1,16], index: 9, kind: input, shape index: {}]
  %s10 = inlined_call_operand.vmem [shape: f32[16,128], index: 10, kind: output, shape index: {}]
  %s11 = sld [smem:[#allocation0]]
  $region50: #{laneatt_forward_pallas.1} parent=0
    _
  %s13 = ssub.s32 1, %s11
  %s14 = scalar_select 0, %s13, %s11
  // Predicated region
  $region2: #{laneatt_forward_pallas.1} parent=0 // pred_check
    _
  $region3: #{laneatt_forward_pallas.1} parent=0 // pred_check_branch
    %16 = sbr.rel (0) target = $region5
  $region4: #{laneatt_forward_pallas.1} parent=0 // pred_region
    _
  $region5: #{laneatt_forward_pallas.1} parent=0 // pred_fallthru
    _
  // Predicated region
  $region6: #{laneatt_forward_pallas.1} parent=0 // pred_check
    _
  $region7: #{laneatt_forward_pallas.1} parent=0 // pred_check_branch
    %18 = sbr.rel (0) target = $region9
  $region8: #{laneatt_forward_pallas.1} parent=0 // pred_region
    _
  $region9: #{laneatt_forward_pallas.1} parent=0 // pred_fallthru
    _
  // Predicated region
  $region10: #{laneatt_forward_pallas.1} parent=0 // pred_check
    _
  $region11: #{laneatt_forward_pallas.1} parent=0 // pred_check_branch
    %20 = sbr.rel (0) target = $region13
  $region12: #{laneatt_forward_pallas.1} parent=0 // pred_region
    _
  $region13: #{laneatt_forward_pallas.1} parent=0 // pred_fallthru
    _
  // Predicated region
  $region14: #{laneatt_forward_pallas.1} parent=0 // pred_check
    _
  $region15: #{laneatt_forward_pallas.1} parent=0 // pred_check_branch
    %22 = sbr.rel (0) target = $region17
  $region16: #{laneatt_forward_pallas.1} parent=0 // pred_region
    _
  $region17: #{laneatt_forward_pallas.1} parent=0 // pred_fallthru
    _
  // Predicated region
  $region18: #{laneatt_forward_pallas.1} parent=0 // pred_check
    _
  $region19: #{laneatt_forward_pallas.1} parent=0 // pred_check_branch
    %24 = sbr.rel (0) target = $region21
  $region20: #{laneatt_forward_pallas.1} parent=0 // pred_region
    _
  $region21: #{laneatt_forward_pallas.1} parent=0 // pred_fallthru
    _
  // Predicated region
  $region22: #{laneatt_forward_pallas.1} parent=0 // pred_check
    _
  $region23: #{laneatt_forward_pallas.1} parent=0 // pred_check_branch
    %26 = sbr.rel (0) target = $region25
  $region24: #{laneatt_forward_pallas.1} parent=0 // pred_region
    _
  $region25: #{laneatt_forward_pallas.1} parent=0 // pred_fallthru
    _
  // Predicated region
  $region26: #{laneatt_forward_pallas.1} parent=0 // pred_check
    _
  $region27: #{laneatt_forward_pallas.1} parent=0 // pred_check_branch
    %28 = sbr.rel (0) target = $region29
  $region28: #{laneatt_forward_pallas.1} parent=0 // pred_region
    _
  $region29: #{laneatt_forward_pallas.1} parent=0 // pred_fallthru
    _
  // Predicated region
  $region30: #{laneatt_forward_pallas.1} parent=0 // pred_check
    _
  $region31: #{laneatt_forward_pallas.1} parent=0 // pred_check_branch
    %30 = sbr.rel (0) target = $region33
  $region32: #{laneatt_forward_pallas.1} parent=0 // pred_region
    _
  $region33: #{laneatt_forward_pallas.1} parent=0 // pred_fallthru
    _
  // Predicated region
  $region34: #{laneatt_forward_pallas.1} parent=0 // pred_check
    _
  $region35: #{laneatt_forward_pallas.1} parent=0 // pred_check_branch
    %32 = sbr.rel (0) target = $region37
  $region36: #{laneatt_forward_pallas.1} parent=0 // pred_region
    _
  $region37: #{laneatt_forward_pallas.1} parent=0 // pred_fallthru
    _
  // Predicated region
  $region38: #{laneatt_forward_pallas.1} parent=0 // pred_check
    _
  $region39: #{laneatt_forward_pallas.1} parent=0 // pred_check_branch
    %34 = sbr.rel (0) target = $region41
  $region40: #{laneatt_forward_pallas.1} parent=0 // pred_region
    _
  $region41: #{laneatt_forward_pallas.1} parent=0 // pred_fallthru
    _
  %v35 = vld [vmem:[%s0] sm:$0xff]
  %v36 = vld [vmem:[%s0 + $0x8] sm:$0xff]
  %v37 = vld [vmem:[%s0 + $0x10] sm:$0xff]
  %v38 = vld [vmem:[%s0 + $0x18] sm:$0xff]
  %v39 = vld [vmem:[%s0 + $0x20] sm:$0xff]
  %v40 = vld [vmem:[%s0 + $0x28] sm:$0xff]
  %v41 = vld [vmem:[%s0 + $0x30] sm:$0xff]
  %v42 = vld [vmem:[%s0 + $0x38] sm:$0xff]
  %v43 = vld [vmem:[%s0 + $0x40] sm:$0xff]
  %v44 = vld [vmem:[%s0 + $0x48] sm:$0xff]
  %v45 = vld [vmem:[%s0 + $0x50] sm:$0xff]
  %v46 = vld [vmem:[%s0 + $0x58] sm:$0xff]
  %v47 = vld [vmem:[%s0 + $0x60] sm:$0xff]
  %v48 = vld [vmem:[%s0 + $0x68] sm:$0xff]
  %v49 = vld [vmem:[%s0 + $0x70] sm:$0xff]
  %v50 = vld [vmem:[%s0 + $0x78] sm:$0xff]
  %v51 = vld [vmem:[%s1] sm:$0xff]
  %v52 = vld [vmem:[%s1 + $0x8] sm:$0xff]
  %v53 = vld [vmem:[%s1 + $0x10] sm:$0xff]
  %v54 = vld [vmem:[%s1 + $0x18] sm:$0x7]
  %v55 = vld [vmem:[%s2] sm:$0x1]
  %v57 = vperm.slane %v55, 0
  %vm59 = vcmask 220160
  %v61 = vsel %vm59, %v35, 0
  %v64 = vsel %vm59, %v36, 0
  %v67 = vsel %vm59, %v37, 0
  %v70 = vsel %vm59, %v38, 0
  %v73 = vsel %vm59, %v39, 0
  %v76 = vsel %vm59, %v40, 0
  %v79 = vsel %vm59, %v41, 0
  %v82 = vsel %vm59, %v42, 0
  %v85 = vsel %vm59, %v43, 0
  %v88 = vsel %vm59, %v44, 0
  %v91 = vsel %vm59, %v45, 0
  %v94 = vsel %vm59, %v46, 0
  %v97 = vsel %vm59, %v47, 0
  %v100 = vsel %vm59, %v48, 0
  %v103 = vsel %vm59, %v49, 0
  %v106 = vsel %vm59, %v50, 0
  %vm108 = vcmask 1042432
  %v110 = vsel %vm108, %v54, 0
  %112 = vmatpush.msra.mxu0 0.0
  %113 = vmatpush.msra.mxu0 0.0
  %114 = vmatpush.msra.mxu0 0.0
  %115 = vmatpush.msra.mxu0 0.0
  %116 = vmatpush.msra.mxu0 0.0
  %117 = vmatpush.msra.mxu0 0.0
  %118 = vmatpush.msra.mxu0 0.0
  %119 = vmatpush.msra.mxu0 0.0
  %120 = vmatpush.msra.mxu0 0.0
  %121 = vmatpush.msra.mxu0 0.0
  %122 = vmatpush.msra.mxu0 0.0
  %123 = vmatpush.msra.mxu0 0.0
  %124 = vmatpush.msra.mxu0 %v110
  %125 = vmatpush.msra.mxu0 %v53
  %126 = vmatpush.msra.mxu0 %v52
  %127 = vmatpush.msra.mxu0 %v51
  %128 = vmatmul.f32.gmra.mxu0 %v61
  %v129 = vpop.f32.mrf.mxu0
  %v130 = vadd.f32 %v57, %v129
  %131 = vmatmul.f32.gmra.mxu0 %v64
  %v132 = vpop.f32.mrf.mxu0
  %v133 = vadd.f32 %v57, %v132
  %134 = vmatmul.f32.gmra.mxu0 %v67
  %v135 = vpop.f32.mrf.mxu0
  %v136 = vadd.f32 %v57, %v135
  %137 = vmatmul.f32.gmra.mxu0 %v70
  %v138 = vpop.f32.mrf.mxu0
  %v139 = vadd.f32 %v57, %v138
  %140 = vmatmul.f32.gmra.mxu0 %v73
  %v141 = vpop.f32.mrf.mxu0
  %v142 = vadd.f32 %v57, %v141
  %143 = vmatmul.f32.gmra.mxu0 %v76
  %v144 = vpop.f32.mrf.mxu0
  %v145 = vadd.f32 %v57, %v144
  %146 = vmatmul.f32.gmra.mxu0 %v79
  %v147 = vpop.f32.mrf.mxu0
  %v148 = vadd.f32 %v57, %v147
  %149 = vmatmul.f32.gmra.mxu0 %v82
  %v150 = vpop.f32.mrf.mxu0
  %v151 = vadd.f32 %v57, %v150
  %152 = vmatmul.f32.gmra.mxu0 %v85
  %v153 = vpop.f32.mrf.mxu0
  %v154 = vadd.f32 %v57, %v153
  %155 = vmatmul.f32.gmra.mxu0 %v88
  %v156 = vpop.f32.mrf.mxu0
  %v157 = vadd.f32 %v57, %v156
  %158 = vmatmul.f32.gmra.mxu0 %v91
  %v159 = vpop.f32.mrf.mxu0
  %v160 = vadd.f32 %v57, %v159
  %161 = vmatmul.f32.gmra.mxu0 %v94
  %v162 = vpop.f32.mrf.mxu0
  %v163 = vadd.f32 %v57, %v162
  %164 = vmatmul.f32.gmra.mxu0 %v97
  %v165 = vpop.f32.mrf.mxu0
  %v166 = vadd.f32 %v57, %v165
  %167 = vmatmul.f32.gmra.mxu0 %v100
  %v168 = vpop.f32.mrf.mxu0
  %v169 = vadd.f32 %v57, %v168
  %170 = vmatmul.f32.gmra.mxu0 %v103
  %v171 = vpop.f32.mrf.mxu0
  %v172 = vadd.f32 %v57, %v171
  %173 = vmatmul.f32.gmra.mxu0 %v106
  %v174 = vpop.f32.mrf.mxu0
  %v175 = vadd.f32 %v57, %v174
  %176 = vdwg.mxu0
  %v177 = vmax.f32 %v130, 0.0
  %v178 = vmax.f32 %v133, 0.0
  %v179 = vmax.f32 %v136, 0.0
  %v180 = vmax.f32 %v139, 0.0
  %v181 = vmax.f32 %v142, 0.0
  %v182 = vmax.f32 %v145, 0.0
  %v183 = vmax.f32 %v148, 0.0
  %v184 = vmax.f32 %v151, 0.0
  %v185 = vmax.f32 %v154, 0.0
  %v186 = vmax.f32 %v157, 0.0
  %v187 = vmax.f32 %v160, 0.0
  %v188 = vmax.f32 %v163, 0.0
  %v189 = vmax.f32 %v166, 0.0
  %v190 = vmax.f32 %v169, 0.0
  %v191 = vmax.f32 %v172, 0.0
  %v192 = vmax.f32 %v175, 0.0
  %v193 = vld [vmem:[%s3] sm:$0xff]
  %v194 = vld [vmem:[%s3 + $0x8] sm:$0xff]
  %v195 = vld [vmem:[%s4] sm:$0x1]
  %v197 = vperm.slane %v195, 0
  %vm199 = vcmask 130048
  %v201 = vsel %vm199, %v177, 0
  %v204 = vsel %vm199, %v178, 0
  %v207 = vsel %vm199, %v179, 0
  %v210 = vsel %vm199, %v180, 0
  %v213 = vsel %vm199, %v181, 0
  %v216 = vsel %vm199, %v182, 0
  %v219 = vsel %vm199, %v183, 0
  %v222 = vsel %vm199, %v184, 0
  %v225 = vsel %vm199, %v185, 0
  %v228 = vsel %vm199, %v186, 0
  %v231 = vsel %vm199, %v187, 0
  %v234 = vsel %vm199, %v188, 0
  %v237 = vsel %vm199, %v189, 0
  %v240 = vsel %vm199, %v190, 0
  %v243 = vsel %vm199, %v191, 0
  %v246 = vsel %vm199, %v192, 0
  %248 = vmatpush.msra.mxu0 0.0
  %249 = vmatpush.msra.mxu0 0.0
  %250 = vmatpush.msra.mxu0 0.0
  %251 = vmatpush.msra.mxu0 0.0
  %252 = vmatpush.msra.mxu0 0.0
  %253 = vmatpush.msra.mxu0 0.0
  %254 = vmatpush.msra.mxu0 0.0
  %255 = vmatpush.msra.mxu0 0.0
  %256 = vmatpush.msra.mxu0 0.0
  %257 = vmatpush.msra.mxu0 0.0
  %258 = vmatpush.msra.mxu0 0.0
  %259 = vmatpush.msra.mxu0 0.0
  %260 = vmatpush.msra.mxu0 0.0
  %261 = vmatpush.msra.mxu0 0.0
  %262 = vmatpush.msra.mxu0 %v194
  %263 = vmatpush.msra.mxu0 %v193
  %264 = vmatmul.f32.gmra.mxu0 %v201
  %v265 = vpop.f32.mrf.mxu0
  %v266 = vadd.f32 %v197, %v265
  %267 = vmatmul.f32.gmra.mxu0 %v204
  %v268 = vpop.f32.mrf.mxu0
  %v269 = vadd.f32 %v197, %v268
  %270 = vmatmul.f32.gmra.mxu0 %v207
  %v271 = vpop.f32.mrf.mxu0
  %v272 = vadd.f32 %v197, %v271
  %273 = vmatmul.f32.gmra.mxu0 %v210
  %v274 = vpop.f32.mrf.mxu0
  %v275 = vadd.f32 %v197, %v274
  %276 = vmatmul.f32.gmra.mxu0 %v213
  %v277 = vpop.f32.mrf.mxu0
  %v278 = vadd.f32 %v197, %v277
  %279 = vmatmul.f32.gmra.mxu0 %v216
  %v280 = vpop.f32.mrf.mxu0
  %v281 = vadd.f32 %v197, %v280
  %282 = vmatmul.f32.gmra.mxu0 %v219
  %v283 = vpop.f32.mrf.mxu0
  %v284 = vadd.f32 %v197, %v283
  %285 = vmatmul.f32.gmra.mxu0 %v222
  %v286 = vpop.f32.mrf.mxu0
  %v287 = vadd.f32 %v197, %v286
  %288 = vmatmul.f32.gmra.mxu0 %v225
  %v289 = vpop.f32.mrf.mxu0
  %v290 = vadd.f32 %v197, %v289
  %291 = vmatmul.f32.gmra.mxu0 %v228
  %v292 = vpop.f32.mrf.mxu0
  %v293 = vadd.f32 %v197, %v292
  %294 = vmatmul.f32.gmra.mxu0 %v231
  %v295 = vpop.f32.mrf.mxu0
  %v296 = vadd.f32 %v197, %v295
  %297 = vmatmul.f32.gmra.mxu0 %v234
  %v298 = vpop.f32.mrf.mxu0
  %v299 = vadd.f32 %v197, %v298
  %300 = vmatmul.f32.gmra.mxu0 %v237
  %v301 = vpop.f32.mrf.mxu0
  %v302 = vadd.f32 %v197, %v301
  %303 = vmatmul.f32.gmra.mxu0 %v240
  %v304 = vpop.f32.mrf.mxu0
  %v305 = vadd.f32 %v197, %v304
  %306 = vmatmul.f32.gmra.mxu0 %v243
  %v307 = vpop.f32.mrf.mxu0
  %v308 = vadd.f32 %v197, %v307
  %309 = vmatmul.f32.gmra.mxu0 %v246
  %v310 = vpop.f32.mrf.mxu0
  %v311 = vadd.f32 %v197, %v310
  %312 = vdwg.mxu0
  %v313 = vld [vmem:[%s5] sm:$0xff]
  %vm314 = vcmask 64512
  %v316 = vsel %vm314, %v266, 0
  %v319 = vsel %vm314, %v269, 0
  %v322 = vsel %vm314, %v272, 0
  %v325 = vsel %vm314, %v275, 0
  %v328 = vsel %vm314, %v278, 0
  %v331 = vsel %vm314, %v281, 0
  %v334 = vsel %vm314, %v284, 0
  %v337 = vsel %vm314, %v287, 0
  %v340 = vsel %vm314, %v290, 0
  %v343 = vsel %vm314, %v293, 0
  %v346 = vsel %vm314, %v296, 0
  %v349 = vsel %vm314, %v299, 0
  %v352 = vsel %vm314, %v302, 0
  %v355 = vsel %vm314, %v305, 0
  %v358 = vsel %vm314, %v308, 0
  %v361 = vsel %vm314, %v311, 0
  %363 = vmatpush.msra.mxu0 0.0
  %364 = vmatpush.msra.mxu0 0.0
  %365 = vmatpush.msra.mxu0 0.0
  %366 = vmatpush.msra.mxu0 0.0
  %367 = vmatpush.msra.mxu0 0.0
  %368 = vmatpush.msra.mxu0 0.0
  %369 = vmatpush.msra.mxu0 0.0
  %370 = vmatpush.msra.mxu0 0.0
  %371 = vmatpush.msra.mxu0 0.0
  %372 = vmatpush.msra.mxu0 0.0
  %373 = vmatpush.msra.mxu0 0.0
  %374 = vmatpush.msra.mxu0 0.0
  %375 = vmatpush.msra.mxu0 0.0
  %376 = vmatpush.msra.mxu0 0.0
  %377 = vmatpush.msra.mxu0 0.0
  %378 = vmatpush.msra.mxu0 %v313
  %379 = vmatmul.f32.gmra.mxu0 %v316
  %v380 = vpop.f32.mrf.mxu0
  %v381 = vadd.f32 0.0, %v380
  %382 = vmatmul.f32.gmra.mxu0 %v319
  %v383 = vpop.f32.mrf.mxu0
  %v384 = vadd.f32 0.0, %v383
  %385 = vmatmul.f32.gmra.mxu0 %v322
  %v386 = vpop.f32.mrf.mxu0
  %v387 = vadd.f32 0.0, %v386
  %388 = vmatmul.f32.gmra.mxu0 %v325
  %v389 = vpop.f32.mrf.mxu0
  %v390 = vadd.f32 0.0, %v389
  %391 = vmatmul.f32.gmra.mxu0 %v328
  %v392 = vpop.f32.mrf.mxu0
  %v393 = vadd.f32 0.0, %v392
  %394 = vmatmul.f32.gmra.mxu0 %v331
  %v395 = vpop.f32.mrf.mxu0
  %v396 = vadd.f32 0.0, %v395
  %397 = vmatmul.f32.gmra.mxu0 %v334
  %v398 = vpop.f32.mrf.mxu0
  %v399 = vadd.f32 0.0, %v398
  %400 = vmatmul.f32.gmra.mxu0 %v337
  %v401 = vpop.f32.mrf.mxu0
  %v402 = vadd.f32 0.0, %v401
  %403 = vmatmul.f32.gmra.mxu0 %v340
  %v404 = vpop.f32.mrf.mxu0
  %v405 = vadd.f32 0.0, %v404
  %406 = vmatmul.f32.gmra.mxu0 %v343
  %v407 = vpop.f32.mrf.mxu0
  %v408 = vadd.f32 0.0, %v407
  %409 = vmatmul.f32.gmra.mxu0 %v346
  %v410 = vpop.f32.mrf.mxu0
  %v411 = vadd.f32 0.0, %v410
  %412 = vmatmul.f32.gmra.mxu0 %v349
  %v413 = vpop.f32.mrf.mxu0
  %v414 = vadd.f32 0.0, %v413
  %415 = vmatmul.f32.gmra.mxu0 %v352
  %v416 = vpop.f32.mrf.mxu0
  %v417 = vadd.f32 0.0, %v416
  %418 = vmatmul.f32.gmra.mxu0 %v355
  %v419 = vpop.f32.mrf.mxu0
  %v420 = vadd.f32 0.0, %v419
  %421 = vmatmul.f32.gmra.mxu0 %v358
  %v422 = vpop.f32.mrf.mxu0
  %v423 = vadd.f32 0.0, %v422
  %424 = vmatmul.f32.gmra.mxu0 %v361
  %v425 = vpop.f32.mrf.mxu0
  %v426 = vadd.f32 0.0, %v425
  %427 = vdwg.mxu0
  %v428 = vld [vmem:[%s6] sm:$0xff]
  %v429 = vld [vmem:[%s6 + $0x8] sm:$0xff]
  %v430 = vld [vmem:[%s6 + $0x10] sm:$0xff]
  %v431 = vld [vmem:[%s6 + $0x18] sm:$0xff]
  %v432 = vld [vmem:[%s6 + $0x20] sm:$0xff]
  %v433 = vld [vmem:[%s6 + $0x28] sm:$0xff]
  %v434 = vld [vmem:[%s6 + $0x30] sm:$0xff]
  %v435 = vld [vmem:[%s6 + $0x38] sm:$0xff]
  %v436 = vld [vmem:[%s6 + $0x40] sm:$0xff]
  %v437 = vld [vmem:[%s6 + $0x48] sm:$0xff]
  %v438 = vld [vmem:[%s6 + $0x50] sm:$0xff]
  %v439 = vld [vmem:[%s6 + $0x58] sm:$0xff]
  %v440 = vld [vmem:[%s6 + $0x60] sm:$0xff]
  %v441 = vld [vmem:[%s6 + $0x68] sm:$0xff]
  %v442 = vld [vmem:[%s6 + $0x70] sm:$0xff]
  %v443 = vld [vmem:[%s6 + $0x78] sm:$0xff]
  %v444 = vmul.f32 %v381, %v428
  %v445 = vmul.f32 %v384, %v429
  %v446 = vmul.f32 %v387, %v430
  %v447 = vmul.f32 %v390, %v431
  %v448 = vmul.f32 %v393, %v432
  %v449 = vmul.f32 %v396, %v433
  %v450 = vmul.f32 %v399, %v434
  %v451 = vmul.f32 %v402, %v435
  %v452 = vmul.f32 %v405, %v436
  %v453 = vmul.f32 %v408, %v437
  %v454 = vmul.f32 %v411, %v438
  %v455 = vmul.f32 %v414, %v439
  %v456 = vmul.f32 %v417, %v440
  %v457 = vmul.f32 %v420, %v441
  %v458 = vmul.f32 %v423, %v442
  %v459 = vmul.f32 %v426, %v443
  %v460 = vld [vmem:[%s7] sm:$0xff]
  %v461 = vld [vmem:[%s7 + $0x8] sm:$0xff]
  %v462 = vld [vmem:[%s7 + $0x10] sm:$0xff]
  %v463 = vld [vmem:[%s7 + $0x18] sm:$0xff]
  %464 = vmatpush.msra.mxu0 %v459
  %465 = vmatpush.msra.mxu0 %v458
  %466 = vmatpush.msra.mxu0 %v457
  %467 = vmatpush.msra.mxu0 %v456
  %468 = vmatpush.msra.mxu0 %v455
  %469 = vmatpush.msra.mxu0 %v454
  %470 = vmatpush.msra.mxu0 %v453
  %471 = vmatpush.msra.mxu0 %v452
  %472 = vmatpush.msra.mxu0 %v451
  %473 = vmatpush.msra.mxu0 %v450
  %474 = vmatpush.msra.mxu0 %v449
  %475 = vmatpush.msra.mxu0 %v448
  %476 = vmatpush.msra.mxu0 %v447
  %477 = vmatpush.msra.mxu0 %v446
  %478 = vmatpush.msra.mxu0 %v445
  %479 = vmatpush.msra.mxu0 %v444
  %480 = vmatmul.f32.gmra.mxu0 %v460
  %v481 = vpop.f32.mrf.mxu0
  %v482 = vadd.f32 0.0, %v481
  %483 = vmatmul.f32.gmra.mxu0 %v461
  %v484 = vpop.f32.mrf.mxu0
  %v485 = vadd.f32 0.0, %v484
  %486 = vmatmul.f32.gmra.mxu0 %v462
  %v487 = vpop.f32.mrf.mxu0
  %v488 = vadd.f32 0.0, %v487
  %489 = vmatmul.f32.gmra.mxu0 %v463
  %v490 = vpop.f32.mrf.mxu0
  %v491 = vadd.f32 0.0, %v490
  %492 = vdwg.mxu0
  %v493 = vld [vmem:[%s8] sm:$0xff]
  %v494 = vld [vmem:[%s8 + $0x8] sm:$0xff]
  %v495 = vld [vmem:[%s8 + $0x10] sm:$0xff]
  %v496 = vld [vmem:[%s8 + $0x18] sm:$0xff]
  %v497 = vld [vmem:[%s8 + $0x20] sm:$0xff]
  %v498 = vld [vmem:[%s8 + $0x28] sm:$0xff]
  %v499 = vld [vmem:[%s8 + $0x30] sm:$0xff]
  %v500 = vld [vmem:[%s8 + $0x38] sm:$0xff]
  %v501 = vld [vmem:[%s9] sm:$0x1]
  %v503 = vperm.slane %v501, 0
  %vm505 = vcmask 523264
  %v507 = vsel %vm505, %v482, 0
  %v510 = vsel %vm505, %v485, 0
  %v513 = vsel %vm505, %v488, 0
  %v516 = vsel %vm505, %v491, 0
  %518 = vmatpush.msra.mxu0 0.0
  %519 = vmatpush.msra.mxu0 0.0
  %520 = vmatpush.msra.mxu0 0.0
  %521 = vmatpush.msra.mxu0 0.0
  %522 = vmatpush.msra.mxu0 0.0
  %523 = vmatpush.msra.mxu0 0.0
  %524 = vmatpush.msra.mxu0 0.0
  %525 = vmatpush.msra.mxu0 0.0
  %526 = vmatpush.msra.mxu0 %v500
  %527 = vmatpush.msra.mxu0 %v499
  %528 = vmatpush.msra.mxu0 %v498
  %529 = vmatpush.msra.mxu0 %v497
  %530 = vmatpush.msra.mxu0 %v496
  %531 = vmatpush.msra.mxu0 %v495
  %532 = vmatpush.msra.mxu0 %v494
  %533 = vmatpush.msra.mxu0 %v493
  %534 = vmatmul.f32.gmra.mxu0 %v507
  %v535 = vpop.f32.mrf.mxu0
  %v536 = vadd.f32 %v503, %v535
  %537 = vmatmul.f32.gmra.mxu0 %v510
  %v538 = vpop.f32.mrf.mxu0
  %v539 = vadd.f32 %v503, %v538
  %540 = vmatmul.f32.gmra.mxu0 %v513
  %v541 = vpop.f32.mrf.mxu0
  %v542 = vadd.f32 %v503, %v541
  %543 = vmatmul.f32.gmra.mxu0 %v516
  %v544 = vpop.f32.mrf.mxu0
  %v545 = vadd.f32 %v503, %v544
  %546 = vdwg.mxu0
  %v547 = vsel %vm199, %v536, -inf
  %548 = vmax.xlane.f32.xlu0 %v547
  %v549 = vpop.xlane.xlu0 %548
  %v550 = vsel %vm199, %v539, -inf
  %551 = vmax.xlane.f32.xlu0 %v550
  %v552 = vpop.xlane.xlu0 %551
  %v553 = vsel %vm199, %v542, -inf
  %554 = vmax.xlane.f32.xlu0 %v553
  %v555 = vpop.xlane.xlu0 %554
  %v556 = vsel %vm199, %v545, -inf
  %557 = vmax.xlane.f32.xlu0 %v556
  %v558 = vpop.xlane.xlu0 %557
  %v559 = vsub.f32 %v536, %v549
  %v560 = vsub.f32 %v539, %v552
  %v561 = vsub.f32 %v542, %v555
  %v562 = vsub.f32 %v545, %v558
  %v563 = vmul.f32 %v559, 1.442695
  %v564 = vpow.pop %v563
  %v565 = vmul.f32 %v560, 1.442695
  %v566 = vpow.pop %v565
  %v567 = vmul.f32 %v561, 1.442695
  %v568 = vpow.pop %v567
  %v569 = vmul.f32 %v562, 1.442695
  %v570 = vpow.pop %v569
  %v571 = vsel %vm199, %v564, 0.0
  %572 = vadd.xlane.f32.xlu0 %v571
  %v573 = vpop.xlane.xlu0 %572
  %v574 = vsel %vm199, %v566, 0.0
  %575 = vadd.xlane.f32.xlu0 %v574
  %v576 = vpop.xlane.xlu0 %575
  %v577 = vsel %vm199, %v568, 0.0
  %578 = vadd.xlane.f32.xlu0 %v577
  %v579 = vpop.xlane.xlu0 %578
  %v580 = vsel %vm199, %v570, 0.0
  %581 = vadd.xlane.f32.xlu0 %v580
  %v582 = vpop.xlane.xlu0 %581
  %v583 = vrcp.pop %v573
  %v584 = vrcp.pop %v576
  %v585 = vrcp.pop %v579
  %v586 = vrcp.pop %v582
  %v587 = vmul.f32 %v564, %v583
  %v588 = vmul.f32 %v566, %v584
  %v589 = vmul.f32 %v568, %v585
  %v590 = vmul.f32 %v570, %v586
  %vm591 = vcmask 1047680
  %592 = vrot.lane.b32.xlu0 %v587, 16
  %v593 = vpop.permute.xlu0 %592
  %v594 = vsel %vm591, %v593, %v587
  %595 = vrot.lane.b32.xlu0 %v588, 16
  %v596 = vpop.permute.xlu0 %595
  %v597 = vsel %vm591, %v596, %v588
  %598 = vrot.lane.b32.xlu0 %v589, 16
  %v599 = vpop.permute.xlu0 %598
  %v600 = vsel %vm591, %v599, %v589
  %601 = vrot.lane.b32.xlu0 %v590, 16
  %v602 = vpop.permute.xlu0 %601
  %v603 = vsel %vm591, %v602, %v590
  %604 = vrot.lane.b32.xlu0 %v594, 16
  %v605 = vpop.permute.xlu0 %604
  %606 = vrot.lane.b32.xlu0 %v597, 16
  %v607 = vpop.permute.xlu0 %606
  %608 = vrot.lane.b32.xlu0 %v600, 16
  %v609 = vpop.permute.xlu0 %608
  %610 = vrot.lane.b32.xlu0 %v603, 16
  %v611 = vpop.permute.xlu0 %610
  %v612 = vsel %vm591, %v605, %v587
  %v613 = vsel %vm591, %v607, %v588
  %v614 = vsel %vm591, %v609, %v589
  %v615 = vsel %vm591, %v611, %v590
  %v616 = vlaneseq
  %v617 = vshrl.u32 %v616, 7
  %v618 = vadd.s32 %v617, 8
  %v619 = vadd.s32 %v617, 16
  %v620 = vadd.s32 %v617, 24
  %vm621 = vcmp.lt.s32.totalorder %v617, 0
  %v622 = vsub.s32 0, %v617
  %v623 = vsel %vm621, %v622, %v617
  %v624 = vshrl.u32 %v623, 4
  %v625 = vand.u32 %v623, 15
  %v626 = vsub.s32 0, %v625
  %v627 = vsel %vm621, %v626, %v625
  %vm628 = vcmp.lt.s32.totalorder %v618, 0
  %v629 = vsub.s32 0, %v618
  %v630 = vsel %vm628, %v629, %v618
  %v631 = vshrl.u32 %v630, 4
  %v632 = vand.u32 %v630, 15
  %v633 = vsub.s32 0, %v632
  %v634 = vsel %vm628, %v633, %v632
  %vm635 = vcmp.lt.s32.totalorder %v619, 0
  %v636 = vsub.s32 0, %v619
  %v637 = vsel %vm635, %v636, %v619
  %v638 = vshrl.u32 %v637, 4
  %v639 = vand.u32 %v637, 15
  %v640 = vsub.s32 0, %v639
  %v641 = vsel %vm635, %v640, %v639
  %vm642 = vcmp.lt.s32.totalorder %v620, 0
  %v643 = vsub.s32 0, %v620
  %v644 = vsel %vm642, %v643, %v620
  %v645 = vshrl.u32 %v644, 4
  %v646 = vand.u32 %v644, 15
  %v647 = vsub.s32 0, %v646
  %v648 = vsel %vm642, %v647, %v646
  %vm649 = vcmp.ne.s32.totalorder %v627, 0
  %vm650 = vcmp.ne.s32.totalorder %v634, 0
  %vm651 = vcmp.ne.s32.totalorder %v641, 0
  %vm652 = vcmp.ne.s32.totalorder %v648, 0
  %vm653 = vcmp.lt.s32.totalorder %v627, 0
  %vm654 = vcmp.lt.s32.totalorder %v634, 0
  %vm655 = vcmp.lt.s32.totalorder %v641, 0
  %vm656 = vcmp.lt.s32.totalorder %v648, 0
  %vm657 = vmand %vm653, %vm649
  %vm658 = vmand %vm654, %vm650
  %vm659 = vmand %vm655, %vm651
  %vm660 = vmand %vm656, %vm652
  %v661 = vadd.s32 %v627, 16
  %v662 = vadd.s32 %v634, 16
  %v663 = vadd.s32 %v641, 16
  %v664 = vadd.s32 %v648, 16
  %v665 = vsel %vm657, %v661, %v627
  %v666 = vsel %vm658, %v662, %v634
  %v667 = vsel %vm659, %v663, %v641
  %v668 = vsel %vm660, %v664, %v648
  %v669 = vlaneseq
  %v670 = vand.u32 %v669, 127
  %vm671 = vcmp.lt.s32.totalorder %v670, %v665
  %vm672 = vcmp.lt.s32.totalorder %v670, %v666
  %vm673 = vcmp.lt.s32.totalorder %v670, %v667
  %vm674 = vcmp.lt.s32.totalorder %v670, %v668
  %vm675 = vcmp.eq.s32.totalorder %v670, %v665
  %vm676 = vcmp.eq.s32.totalorder %v670, %v666
  %vm677 = vcmp.eq.s32.totalorder %v670, %v667
  %vm678 = vcmp.eq.s32.totalorder %v670, %v668
  %683 = vrot.lane.b32.xlu0 %v612, 113
  %v684 = vpop.permute.xlu0 %683
  %685 = vrot.lane.b32.xlu0 %v613, 113
  %v686 = vpop.permute.xlu0 %685
  %687 = vrot.lane.b32.xlu0 %v614, 113
  %v688 = vpop.permute.xlu0 %687
  %689 = vrot.lane.b32.xlu0 %v615, 113
  %v690 = vpop.permute.xlu0 %689
  %v695 = vsel %vm675, 0.0, %v684
  %v696 = vsel %vm676, 0.0, %v686
  %v697 = vsel %vm677, 0.0, %v688
  %v698 = vsel %vm678, 0.0, %v690
  %v699 = vsel %vm671, %v587, %v695
  %v700 = vsel %vm672, %v588, %v696
  %v701 = vsel %vm673, %v589, %v697
  %v702 = vsel %vm674, %v590, %v698
  %v704 = vsel %vm199, %v699, 0
  %v707 = vsel %vm199, %v700, 0
  %709 = vmatpush.msra.mxu0 0.0
  %710 = vmatpush.msra.mxu0 0.0
  %711 = vmatpush.msra.mxu0 0.0
  %712 = vmatpush.msra.mxu0 0.0
  %713 = vmatpush.msra.mxu0 0.0
  %714 = vmatpush.msra.mxu0 0.0
  %715 = vmatpush.msra.mxu0 0.0
  %716 = vmatpush.msra.mxu0 0.0
  %717 = vmatpush.msra.mxu0 0.0
  %718 = vmatpush.msra.mxu0 0.0
  %719 = vmatpush.msra.mxu0 0.0
  %720 = vmatpush.msra.mxu0 0.0
  %721 = vmatpush.msra.mxu0 0.0
  %722 = vmatpush.msra.mxu0 0.0
  %723 = vmatpush.msra.mxu0 %v485
  %724 = vmatpush.msra.mxu0 %v482
  %725 = vmatmul.f32.gmra.mxu0 %v704
  %v726 = vpop.f32.mrf.mxu0
  %v727 = vadd.f32 0.0, %v726
  %728 = vmatmul.f32.gmra.mxu0 %v707
  %v729 = vpop.f32.mrf.mxu0
  %v730 = vadd.f32 0.0, %v729
  %731 = vdwg.mxu0
  %732 = vst.msk [vmem:[%s10] sm:$0xff] %vm505, %v727
  %733 = vst.msk [vmem:[%s10 + $0x8] sm:$0xff] %vm505, %v730
  %v735 = vsel %vm199, %v701, 0
  %v738 = vsel %vm199, %v702, 0
  %740 = vmatpush.msra.mxu0 0.0
  %741 = vmatpush.msra.mxu0 0.0
  %742 = vmatpush.msra.mxu0 0.0
  %743 = vmatpush.msra.mxu0 0.0
  %744 = vmatpush.msra.mxu0 0.0
  %745 = vmatpush.msra.mxu0 0.0
  %746 = vmatpush.msra.mxu0 0.0
  %747 = vmatpush.msra.mxu0 0.0
  %748 = vmatpush.msra.mxu0 0.0
  %749 = vmatpush.msra.mxu0 0.0
  %750 = vmatpush.msra.mxu0 0.0
  %751 = vmatpush.msra.mxu0 0.0
  %752 = vmatpush.msra.mxu0 0.0
  %753 = vmatpush.msra.mxu0 0.0
  %754 = vmatpush.msra.mxu0 %v491
  %755 = vmatpush.msra.mxu0 %v488
  %756 = vmatmul.f32.gmra.mxu0 %v735
  %v757 = vpop.f32.mrf.mxu0
  %v758 = vadd.f32 0.0, %v757
  %759 = vmatmul.f32.gmra.mxu0 %v738
  %v760 = vpop.f32.mrf.mxu0
  %v761 = vadd.f32 0.0, %v760
  %762 = vdwg.mxu0
  %765 = vrot.lane.b32.xlu0 %v758, 64
  %v766 = vpop.permute.xlu0 %765
  %767 = vrot.lane.b32.xlu0 %v761, 64
  %v768 = vpop.permute.xlu0 %767
  %vm771 = vcmask 1048064
  %772 = vst.msk [vmem:[%s10] sm:$0xff] %vm771, %v766
  %773 = vst.msk [vmem:[%s10 + $0x8] sm:$0xff] %vm771, %v768
  // Predicated region
  $region42: #{laneatt_forward_pallas.1} parent=0 // pred_check
    _
  $region43: #{laneatt_forward_pallas.1} parent=0 // pred_check_branch
    %775 = sbr.rel (0) target = $region45
  $region44: #{laneatt_forward_pallas.1} parent=0 // pred_region
    _
  $region45: #{laneatt_forward_pallas.1} parent=0 // pred_fallthru
    _
  // Predicated region
  $region46: #{laneatt_forward_pallas.1} parent=0 // pred_check
    _
  $region47: #{laneatt_forward_pallas.1} parent=0 // pred_check_branch
    %777 = sbr.rel (0) target = $region49
  $region48: #{laneatt_forward_pallas.1} parent=0 // pred_region
    _
  $region49: #{laneatt_forward_pallas.1} parent=0 // pred_fallthru
    _

</llo_original>
